<compile_context>
chip_gen: v6e
topology: v6e:2x2x1
jax: 0.10.0
libtpu: 0.0.40
codegen_flags: <defaults>
</compile_context>

<pallas_src>
import functools

import jax
import jax.numpy as jnp
from jax import lax
from jax.experimental import pallas as pl
from jax.experimental.pallas import tpu as pltpu

# ----------------------------- configuration -------------------------------
B = 2            # batch
T = 8            # num_tokens (== context_length here)
D_IN = 32        # d_in
D_OUT = 32       # d_out
NUM_HEADS = 4
HEAD_DIM = D_OUT // NUM_HEADS
DROPOUT_P = 0.0  # TODO(synk): train-mode dropout (PRNG mask + 1/(1-p) scale) not
                 #             implemented; nn.Dropout is identity for p=0 / eval.

MASK_BIAS = -1e30  # large finite negative instead of -inf (avoids inf arithmetic)


# ------------------------------- kernel ------------------------------------
def mha_kernel(x_ref, wqkv_ref, wo_ref, bo_ref, o_ref, *, num_heads, head_dim, d_out):
    # Per grid step (one batch element):
    #   x_ref:    (T, D_IN)          f32
    #   wqkv_ref: (D_IN, 3*D_OUT)    bf16, [Wq/sqrt(hd) | Wk | Wv]
    #   wo_ref:   (D_OUT, D_PAD)     bf16, lane-padded to multiple of 128
    #   bo_ref:   (1, D_PAD)         f32,  lane-padded
    #   o_ref:    (T, D_PAD)         f32,  lane-dense store
    t = x_ref.shape[0]

    # Fused QKV projection: one MXU matmul (bf16 operands, f32 accumulation).
    x = x_ref[...].astype(jnp.bfloat16)
    qkv = jnp.dot(x, wqkv_ref[...], preferred_element_type=jnp.float32)  # (T, 3*D_OUT)

    # Per-block (t, t) causal additive bias. Softmax scale is already folded
    # into the Wq columns of wqkv, so no per-tile multiply is needed here.
    row = lax.broadcasted_iota(jnp.int32, (t, t), 0)
    col = lax.broadcasted_iota(jnp.int32, (t, t), 1)
    bias = jnp.where(row >= col, 0.0, MASK_BIAS).astype(jnp.float32)

    qkv_b = qkv.astype(jnp.bfloat16)  # bf16 operands for the per-head matmuls

    # Per-head attention. NOTE: K=head_dim=8 contractions badly under-fill the
    # MXU; at real sizes use head_dim >= 128 or a flash-style restructuring.
    ctx_parts = []
    for h in range(num_heads):
        lo = h * head_dim
        qh = qkv_b[:, lo:lo + head_dim]                          # (T, hd)
        kh = qkv_b[:, d_out + lo:d_out + lo + head_dim]          # (T, hd)
        vh = qkv_b[:, 2 * d_out + lo:2 * d_out + lo + head_dim]  # (T, hd)

        # scores = qh @ kh^T without materializing a transpose (f32 acc)
        s = lax.dot_general(qh, kh, (((1,), (1,)), ((), ())),
                            preferred_element_type=jnp.float32)  # (T, T)
        s = s + bias

        # numerically-stable softmax in f32 (masked entries underflow to 0)
        m = jnp.max(s, axis=-1, keepdims=True)
        e = jnp.exp(s - m)
        denom = jnp.sum(e, axis=-1, keepdims=True)
        attn = e * pl.reciprocal(denom, approx=True)             # EUP slot, no divide

        # (dropout p=0.0 -> identity)
        ctx_parts.append(jnp.dot(attn.astype(jnp.bfloat16), vh,
                                 preferred_element_type=jnp.float32))  # (T, hd)

    # Concatenate heads along lanes, then ONE output projection with K=d_out.
    ctx = jnp.concatenate(ctx_parts, axis=-1)                    # (T, D_OUT) f32
    out = jnp.dot(ctx.astype(jnp.bfloat16), wo_ref[...],
                  preferred_element_type=jnp.float32)            # (T, D_PAD)
    o_ref[...] = (out + bo_ref[...]).astype(o_ref.dtype)         # lane-dense store


# --------------------- one-time parameter preparation -----------------------
def prepare_params(wq, wk, wv, wo, bo, num_heads):
    """Init-time weight transforms (NOT per-call): fuse QKV, fold the softmax
    scale into Wq, lane-pad Wo/bo to a multiple of 128, cast MXU weights to
    bf16."""
    d_out = wq.shape[1]
    head_dim = d_out // num_heads
    d_pad = ((d_out + 127) // 128) * 128

    wq_scaled = wq * jnp.float32(1.0 / (head_dim ** 0.5))
    wqkv = jnp.concatenate([wq_scaled, wk, wv], axis=1).astype(jnp.bfloat16)

    wo_pad = jnp.zeros((d_out, d_pad), jnp.bfloat16)
    wo_pad = wo_pad.at[:, :d_out].set(wo.astype(jnp.bfloat16))
    bo_pad = jnp.zeros((1, d_pad), jnp.float32)
    bo_pad = bo_pad.at[:, :d_out].set(bo.astype(jnp.float32))
    return wqkv, wo_pad, bo_pad


# ------------------------------ wrapper -------------------------------------
@functools.partial(jax.jit, static_argnames=("num_heads",))
def mha_pallas(x, wqkv, wo_pad, bo_pad, *, num_heads):
    b, t, d_in = x.shape
    three_d_out = wqkv.shape[1]
    d_out = three_d_out // 3
    head_dim = d_out // num_heads
    d_pad = wo_pad.shape[1]

    kernel = functools.partial(mha_kernel, num_heads=num_heads,
                               head_dim=head_dim, d_out=d_out)

    out_pad = pl.pallas_call(
        kernel,
        out_shape=jax.ShapeDtypeStruct((b, t, d_pad), x.dtype),
        grid_spec=pltpu.PrefetchScalarGridSpec(
            num_scalar_prefetch=0,
            grid=(b,),                                              # batch axis
            in_specs=[
                pl.BlockSpec((None, t, d_in), lambda i: (i, 0, 0)),       # x[b]
                pl.BlockSpec((d_in, three_d_out), lambda i: (0, 0)),      # fused Wqkv
                pl.BlockSpec((d_out, d_pad), lambda i: (0, 0)),           # Wo (padded)
                pl.BlockSpec((1, d_pad), lambda i: (0, 0)),               # bo (padded)
            ],
            out_specs=pl.BlockSpec((None, t, d_pad), lambda i: (i, 0, 0)),
        ),
        compiler_params=pltpu.CompilerParams(
            dimension_semantics=("parallel",)),   # shards batch across TCs on v7x
    )(x, wqkv, wo_pad, bo_pad)

    return out_pad[:, :, :d_out]   # drop lane padding


# ----------------------- pure-JAX reference (for check) ---------------------
def mha_ref(x, wq, wk, wv, wo, bo):
    b, t, d_in = x.shape
    d_out = wq.shape[1]
    q = x @ wq
    k = x @ wk
    v = x @ wv
    q = q.reshape(b, t, NUM_HEADS, HEAD_DIM).transpose(0, 2, 1, 3)
    k = k.reshape(b, t, NUM_HEADS, HEAD_DIM).transpose(0, 2, 1, 3)
    v = v.reshape(b, t, NUM_HEADS, HEAD_DIM).transpose(0, 2, 1, 3)
    scores = jnp.einsum('bhtd,bhsd->bhts', q, k)
    mask = jnp.triu(jnp.ones((t, t), dtype=bool), k=1)
    scores = jnp.where(mask[None, None], -jnp.inf, scores)
    attn = jax.nn.softmax(scores / HEAD_DIM ** 0.5, axis=-1)
    ctx = jnp.einsum('bhts,bhsd->bhtd', attn, v)
    ctx = ctx.transpose(0, 2, 1, 3).reshape(b, t, d_out)
    return ctx @ wo + bo[0]


# --------------------------------- main --------------------------------------
if __name__ == "__main__":
    key = jax.random.PRNGKey(0)
    kx, kq, kk, kv, ko, kb = jax.random.split(key, 6)

    x = jax.random.normal(kx, (B, T, D_IN), dtype=jnp.float32)

    # Linear weights stored as (in, out) so the kernel computes x @ W, matching
    # PyTorch's x @ W.T with W of shape (out, in).
    scale_in = 1.0 / (D_IN ** 0.5)
    scale_out = 1.0 / (D_OUT ** 0.5)
    wq = jax.random.uniform(kq, (D_IN, D_OUT), jnp.float32, -scale_in, scale_in)
    wk = jax.random.uniform(kk, (D_IN, D_OUT), jnp.float32, -scale_in, scale_in)
    wv = jax.random.uniform(kv, (D_IN, D_OUT), jnp.float32, -scale_in, scale_in)
    wo = jax.random.uniform(ko, (D_OUT, D_OUT), jnp.float32, -scale_out, scale_out)
    bo = jax.random.uniform(kb, (1, D_OUT), jnp.float32, -scale_out, scale_out)

    # One-time parameter prep (fuse QKV, fold scale, pad Wo/bo, cast bf16).
    wqkv, wo_pad, bo_pad = prepare_params(wq, wk, wv, wo, bo, NUM_HEADS)

    out = mha_pallas(x, wqkv, wo_pad, bo_pad, num_heads=NUM_HEADS)
    out = jax.block_until_ready(out)

    ref = mha_ref(x, wq, wk, wv, wo, bo)
    assert out.shape == (B, T, D_OUT)
    # bf16 MXU operands -> compare at a bf16-appropriate tolerance.
    assert jnp.allclose(out, ref, atol=1e-2, rtol=1e-2), "mismatch vs reference"
    assert not bool(jnp.any(jnp.isnan(out))), "NaN in kernel output"

    print("KERNEL_OK")
</pallas_src>

<mosaic_0001>
module attributes {stable_mosaic.version = 11 : i64} {
  func.func @mha_kernel(%arg0: i32, %arg1: memref<1x8x32xf32, #tpu.memory_space<vmem>>, %arg2: memref<32x96xbf16, #tpu.memory_space<vmem>>, %arg3: memref<32x128xbf16, #tpu.memory_space<vmem>>, %arg4: memref<1x128xf32, #tpu.memory_space<vmem>>, %arg5: memref<1x8x128xf32, #tpu.memory_space<vmem>>) attributes {dimension_semantics = [#tpu.dimension_semantics<parallel>], iteration_bounds = array<i64: 2>, scalar_prefetch = 0 : i64, scratch_operands = 0 : i64, tpu.core_type = #tpu.core_type<tc>, window_params = [{transform_indices = @transform_0, window_bounds = array<i64: 1, 8, 32>}, {pipeline_mode = #tpu.pipeline_mode<synchronous>, transform_indices = @transform_1, window_bounds = array<i64: 32, 96>}, {pipeline_mode = #tpu.pipeline_mode<synchronous>, transform_indices = @transform_2, window_bounds = array<i64: 32, 128>}, {pipeline_mode = #tpu.pipeline_mode<synchronous>, transform_indices = @transform_3, window_bounds = array<i64: 1, 128>}, {transform_indices = @transform_4, window_bounds = array<i64: 1, 8, 128>}]} {
    %c0 = arith.constant 0 : index
    %c0_0 = arith.constant 0 : index
    %c0_1 = arith.constant 0 : index
    %0 = vector.load %arg1[%c0, %c0_0, %c0_1] : memref<1x8x32xf32, #tpu.memory_space<vmem>>, vector<1x8x32xf32>
    %1 = vector.shape_cast %0 : vector<1x8x32xf32> to vector<8x32xf32>
    %2 = arith.truncf %1 : vector<8x32xf32> to vector<8x32xbf16>
    %c0_2 = arith.constant 0 : index
    %c0_3 = arith.constant 0 : index
    %3 = vector.load %arg2[%c0_2, %c0_3] : memref<32x96xbf16, #tpu.memory_space<vmem>>, vector<32x96xbf16>
    %cst = arith.constant dense<0.000000e+00> : vector<8x96xf32>
    %4 = tpu.matmul %2, %3, %cst {dimension_numbers = #tpu.dot_dimension_numbers<[1], [0], [0], [1], [0, 0, 1, 1], [], []>} : vector<8x32xbf16>, vector<32x96xbf16>, vector<8x96xf32> -> vector<8x96xf32>
    %5 = tpu.iota {dimensions = array<i32: 0>} : vector<8x8xi32>
    %6 = tpu.iota {dimensions = array<i32: 1>} : vector<8x8xi32>
    %7 = arith.cmpi sge, %5, %6 : vector<8x8xi32>
    %cst_4 = arith.constant 0.000000e+00 : f32
    %cst_5 = arith.constant -1.000000e+30 : f32
    %8 = vector.broadcast %cst_4 : f32 to vector<8x8xf32>
    %9 = vector.broadcast %cst_5 : f32 to vector<8x8xf32>
    %10 = arith.select %7, %8, %9 : vector<8x8xi1>, vector<8x8xf32>
    %11 = arith.truncf %4 : vector<8x96xf32> to vector<8x96xbf16>
    %12 = vector.extract_strided_slice %11 {offsets = [0, 0], sizes = [8, 8], strides = [1, 1]} : vector<8x96xbf16> to vector<8x8xbf16>
    %13 = vector.extract_strided_slice %11 {offsets = [0, 32], sizes = [8, 8], strides = [1, 1]} : vector<8x96xbf16> to vector<8x8xbf16>
    %14 = vector.extract_strided_slice %11 {offsets = [0, 64], sizes = [8, 8], strides = [1, 1]} : vector<8x96xbf16> to vector<8x8xbf16>
    %cst_6 = arith.constant dense<0.000000e+00> : vector<8x8xf32>
    %15 = tpu.matmul %12, %13, %cst_6 {dimension_numbers = #tpu.dot_dimension_numbers<[1], [1], [0], [0], [0, 0, 1, 0], [], []>} : vector<8x8xbf16>, vector<8x8xbf16>, vector<8x8xf32> -> vector<8x8xf32>
    %16 = arith.addf %15, %10 : vector<8x8xf32>
    %cst_7 = arith.constant dense<0xFF800000> : vector<8xf32>
    %17 = vector.multi_reduction <maximumf>, %16, %cst_7 [1] : vector<8x8xf32> to vector<8xf32>
    %18 = vector.shape_cast %17 : vector<8xf32> to vector<8x1xf32>
    %19 = vector.broadcast %18 : vector<8x1xf32> to vector<8x8xf32>
    %20 = arith.subf %16, %19 : vector<8x8xf32>
    %21 = math.exp %20 : vector<8x8xf32>
    %cst_8 = arith.constant dense<0.000000e+00> : vector<8xf32>
    %22 = vector.multi_reduction <add>, %21, %cst_8 [1] : vector<8x8xf32> to vector<8xf32>
    %23 = vector.shape_cast %22 : vector<8xf32> to vector<8x1xf32>
    %24 = tpu.reciprocal %23 {approx = true} : vector<8x1xf32> -> vector<8x1xf32>
    %25 = vector.broadcast %24 : vector<8x1xf32> to vector<8x8xf32>
    %26 = arith.mulf %21, %25 : vector<8x8xf32>
    %27 = arith.truncf %26 : vector<8x8xf32> to vector<8x8xbf16>
    %cst_9 = arith.constant dense<0.000000e+00> : vector<8x8xf32>
    %28 = tpu.matmul %27, %14, %cst_9 {dimension_numbers = #tpu.dot_dimension_numbers<[1], [0], [0], [1], [0, 0, 1, 1], [], []>} : vector<8x8xbf16>, vector<8x8xbf16>, vector<8x8xf32> -> vector<8x8xf32>
    %29 = vector.extract_strided_slice %11 {offsets = [0, 8], sizes = [8, 8], strides = [1, 1]} : vector<8x96xbf16> to vector<8x8xbf16>
    %30 = vector.extract_strided_slice %11 {offsets = [0, 40], sizes = [8, 8], strides = [1, 1]} : vector<8x96xbf16> to vector<8x8xbf16>
    %31 = vector.extract_strided_slice %11 {offsets = [0, 72], sizes = [8, 8], strides = [1, 1]} : vector<8x96xbf16> to vector<8x8xbf16>
    %cst_10 = arith.constant dense<0.000000e+00> : vector<8x8xf32>
    %32 = tpu.matmul %29, %30, %cst_10 {dimension_numbers = #tpu.dot_dimension_numbers<[1], [1], [0], [0], [0, 0, 1, 0], [], []>} : vector<8x8xbf16>, vector<8x8xbf16>, vector<8x8xf32> -> vector<8x8xf32>
    %33 = arith.addf %32, %10 : vector<8x8xf32>
    %cst_11 = arith.constant dense<0xFF800000> : vector<8xf32>
    %34 = vector.multi_reduction <maximumf>, %33, %cst_11 [1] : vector<8x8xf32> to vector<8xf32>
    %35 = vector.shape_cast %34 : vector<8xf32> to vector<8x1xf32>
    %36 = vector.broadcast %35 : vector<8x1xf32> to vector<8x8xf32>
    %37 = arith.subf %33, %36 : vector<8x8xf32>
    %38 = math.exp %37 : vector<8x8xf32>
    %cst_12 = arith.constant dense<0.000000e+00> : vector<8xf32>
    %39 = vector.multi_reduction <add>, %38, %cst_12 [1] : vector<8x8xf32> to vector<8xf32>
    %40 = vector.shape_cast %39 : vector<8xf32> to vector<8x1xf32>
    %41 = tpu.reciprocal %40 {approx = true} : vector<8x1xf32> -> vector<8x1xf32>
    %42 = vector.broadcast %41 : vector<8x1xf32> to vector<8x8xf32>
    %43 = arith.mulf %38, %42 : vector<8x8xf32>
    %44 = arith.truncf %43 : vector<8x8xf32> to vector<8x8xbf16>
    %cst_13 = arith.constant dense<0.000000e+00> : vector<8x8xf32>
    %45 = tpu.matmul %44, %31, %cst_13 {dimension_numbers = #tpu.dot_dimension_numbers<[1], [0], [0], [1], [0, 0, 1, 1], [], []>} : vector<8x8xbf16>, vector<8x8xbf16>, vector<8x8xf32> -> vector<8x8xf32>
    %46 = vector.extract_strided_slice %11 {offsets = [0, 16], sizes = [8, 8], strides = [1, 1]} : vector<8x96xbf16> to vector<8x8xbf16>
    %47 = vector.extract_strided_slice %11 {offsets = [0, 48], sizes = [8, 8], strides = [1, 1]} : vector<8x96xbf16> to vector<8x8xbf16>
    %48 = vector.extract_strided_slice %11 {offsets = [0, 80], sizes = [8, 8], strides = [1, 1]} : vector<8x96xbf16> to vector<8x8xbf16>
    %cst_14 = arith.constant dense<0.000000e+00> : vector<8x8xf32>
    %49 = tpu.matmul %46, %47, %cst_14 {dimension_numbers = #tpu.dot_dimension_numbers<[1], [1], [0], [0], [0, 0, 1, 0], [], []>} : vector<8x8xbf16>, vector<8x8xbf16>, vector<8x8xf32> -> vector<8x8xf32>
    %50 = arith.addf %49, %10 : vector<8x8xf32>
    %cst_15 = arith.constant dense<0xFF800000> : vector<8xf32>
    %51 = vector.multi_reduction <maximumf>, %50, %cst_15 [1] : vector<8x8xf32> to vector<8xf32>
    %52 = vector.shape_cast %51 : vector<8xf32> to vector<8x1xf32>
    %53 = vector.broadcast %52 : vector<8x1xf32> to vector<8x8xf32>
    %54 = arith.subf %50, %53 : vector<8x8xf32>
    %55 = math.exp %54 : vector<8x8xf32>
    %cst_16 = arith.constant dense<0.000000e+00> : vector<8xf32>
    %56 = vector.multi_reduction <add>, %55, %cst_16 [1] : vector<8x8xf32> to vector<8xf32>
    %57 = vector.shape_cast %56 : vector<8xf32> to vector<8x1xf32>
    %58 = tpu.reciprocal %57 {approx = true} : vector<8x1xf32> -> vector<8x1xf32>
    %59 = vector.broadcast %58 : vector<8x1xf32> to vector<8x8xf32>
    %60 = arith.mulf %55, %59 : vector<8x8xf32>
    %61 = arith.truncf %60 : vector<8x8xf32> to vector<8x8xbf16>
    %cst_17 = arith.constant dense<0.000000e+00> : vector<8x8xf32>
    %62 = tpu.matmul %61, %48, %cst_17 {dimension_numbers = #tpu.dot_dimension_numbers<[1], [0], [0], [1], [0, 0, 1, 1], [], []>} : vector<8x8xbf16>, vector<8x8xbf16>, vector<8x8xf32> -> vector<8x8xf32>
    %63 = vector.extract_strided_slice %11 {offsets = [0, 24], sizes = [8, 8], strides = [1, 1]} : vector<8x96xbf16> to vector<8x8xbf16>
    %64 = vector.extract_strided_slice %11 {offsets = [0, 56], sizes = [8, 8], strides = [1, 1]} : vector<8x96xbf16> to vector<8x8xbf16>
    %65 = vector.extract_strided_slice %11 {offsets = [0, 88], sizes = [8, 8], strides = [1, 1]} : vector<8x96xbf16> to vector<8x8xbf16>
    %cst_18 = arith.constant dense<0.000000e+00> : vector<8x8xf32>
    %66 = tpu.matmul %63, %64, %cst_18 {dimension_numbers = #tpu.dot_dimension_numbers<[1], [1], [0], [0], [0, 0, 1, 0], [], []>} : vector<8x8xbf16>, vector<8x8xbf16>, vector<8x8xf32> -> vector<8x8xf32>
    %67 = arith.addf %66, %10 : vector<8x8xf32>
    %cst_19 = arith.constant dense<0xFF800000> : vector<8xf32>
    %68 = vector.multi_reduction <maximumf>, %67, %cst_19 [1] : vector<8x8xf32> to vector<8xf32>
    %69 = vector.shape_cast %68 : vector<8xf32> to vector<8x1xf32>
    %70 = vector.broadcast %69 : vector<8x1xf32> to vector<8x8xf32>
    %71 = arith.subf %67, %70 : vector<8x8xf32>
    %72 = math.exp %71 : vector<8x8xf32>
    %cst_20 = arith.constant dense<0.000000e+00> : vector<8xf32>
    %73 = vector.multi_reduction <add>, %72, %cst_20 [1] : vector<8x8xf32> to vector<8xf32>
    %74 = vector.shape_cast %73 : vector<8xf32> to vector<8x1xf32>
    %75 = tpu.reciprocal %74 {approx = true} : vector<8x1xf32> -> vector<8x1xf32>
    %76 = vector.broadcast %75 : vector<8x1xf32> to vector<8x8xf32>
    %77 = arith.mulf %72, %76 : vector<8x8xf32>
    %78 = arith.truncf %77 : vector<8x8xf32> to vector<8x8xbf16>
    %cst_21 = arith.constant dense<0.000000e+00> : vector<8x8xf32>
    %79 = tpu.matmul %78, %65, %cst_21 {dimension_numbers = #tpu.dot_dimension_numbers<[1], [0], [0], [1], [0, 0, 1, 1], [], []>} : vector<8x8xbf16>, vector<8x8xbf16>, vector<8x8xf32> -> vector<8x8xf32>
    %80 = tpu.concatenate %28, %45, %62, %79 in 1 : vector<8x8xf32>, vector<8x8xf32>, vector<8x8xf32>, vector<8x8xf32> -> vector<8x32xf32>
    %81 = arith.truncf %80 : vector<8x32xf32> to vector<8x32xbf16>
    %c0_22 = arith.constant 0 : index
    %c0_23 = arith.constant 0 : index
    %82 = vector.load %arg3[%c0_22, %c0_23] : memref<32x128xbf16, #tpu.memory_space<vmem>>, vector<32x128xbf16>
    %cst_24 = arith.constant dense<0.000000e+00> : vector<8x128xf32>
    %83 = tpu.matmul %81, %82, %cst_24 {dimension_numbers = #tpu.dot_dimension_numbers<[1], [0], [0], [1], [0, 0, 1, 1], [], []>} : vector<8x32xbf16>, vector<32x128xbf16>, vector<8x128xf32> -> vector<8x128xf32>
    %c0_25 = arith.constant 0 : index
    %c0_26 = arith.constant 0 : index
    %84 = vector.load %arg4[%c0_25, %c0_26] : memref<1x128xf32, #tpu.memory_space<vmem>>, vector<1x128xf32>
    %85 = vector.broadcast %84 : vector<1x128xf32> to vector<8x128xf32>
    %86 = arith.addf %83, %85 : vector<8x128xf32>
    %c0_27 = arith.constant 0 : index
    %c0_28 = arith.constant 0 : index
    %c0_29 = arith.constant 0 : index
    %87 = vector.load %arg5[%c0_27, %c0_28, %c0_29] : memref<1x8x128xf32, #tpu.memory_space<vmem>>, vector<1x8x128xf32>
    %88 = vector.shape_cast %87 : vector<1x8x128xf32> to vector<8x128xf32>
    %89 = vector.shape_cast %86 : vector<8x128xf32> to vector<1x8x128xf32>
    tpu.vector_store %arg5[%c0_27, %c0_28, %c0_29], %89 {strides = array<i32>} : memref<1x8x128xf32, #tpu.memory_space<vmem>>, vector<1x8x128xf32>,
    return
  }
  func.func @transform_0(%arg0: i32) -> (i32, i32, i32) {
    %c0_i32 = arith.constant 0 : i32
    %c0_i32_0 = arith.constant 0 : i32
    %c0_i32_1 = arith.constant 0 : i32
    return %arg0, %c0_i32, %c0_i32_0 : i32, i32, i32
  }
  func.func @transform_1(%arg0: i32) -> (i32, i32) {
    %c0_i32 = arith.constant 0 : i32
    %c0_i32_0 = arith.constant 0 : i32
    %c0_i32_1 = arith.constant 0 : i32
    return %c0_i32, %c0_i32_0 : i32, i32
  }
  func.func @transform_2(%arg0: i32) -> (i32, i32) {
    %c0_i32 = arith.constant 0 : i32
    %c0_i32_0 = arith.constant 0 : i32
    %c0_i32_1 = arith.constant 0 : i32
    return %c0_i32, %c0_i32_0 : i32, i32
  }
  func.func @transform_3(%arg0: i32) -> (i32, i32) {
    %c0_i32 = arith.constant 0 : i32
    %c0_i32_0 = arith.constant 0 : i32
    %c0_i32_1 = arith.constant 0 : i32
    return %c0_i32, %c0_i32_0 : i32, i32
  }
  func.func @transform_4(%arg0: i32) -> (i32, i32, i32) {
    %c0_i32 = arith.constant 0 : i32
    %c0_i32_0 = arith.constant 0 : i32
    %c0_i32_1 = arith.constant 0 : i32
    return %arg0, %c0_i32, %c0_i32_0 : i32, i32, i32
  }
}

</mosaic_0001>

<llo_original>
// kernel: mha_pallas.1
$region0: #{mha_pallas.1}
  #allocation0 [shape = 'u32[]', space=smem, size = 0x4, offset = 0x4, fixed_abs, tag = 'smem constant byte address 0x4 - core index']
  #allocation1 [shape = 'u32[144,128]{1,0:T(1,128)}', space=vmem, size = 0x12000, scoped, tag = 'internal scratch']
  %s0 = inlined_call_operand.hbm [shape: f32[2,8,32], index: 0, kind: input, shape index: {}]
  %s1 = inlined_call_operand.hbm [shape: bf16[32,96], index: 1, kind: input, shape index: {}]
  %s2 = inlined_call_operand.hbm [shape: bf16[32,128], index: 2, kind: input, shape index: {}]
  %s3 = inlined_call_operand.vmem [shape: f32[1,128], index: 3, kind: input, shape index: {}]
  %s4 = inlined_call_operand.hbm [shape: f32[2,8,128], index: 4, kind: output, shape index: {}]
  %s5 = sld [smem:[#allocation0]]
  $region61: #{mha_pallas.1} parent=0
    _
  %s7 = ssub.s32 1, %s5
  %s8 = scalar_select 0, %s7, %s5
  $region1: #{mha_pallas.1} parent=0
    #allocation2 [shape = 'u8[8192]{0}', space=vmem, size = 0x2000, scoped, tag = 'input window, operand 0']
    #allocation3 [shape = 's32[2]{0}', space=sflag, size = 0x8, scoped, tag = 'scoped memory for mha_pallas.1']
    #allocation4 [shape = 's32[2]{0}', space=sflag, size = 0x8, scoped, tag = 'scoped memory for mha_pallas.1']
    #allocation5 [shape = 'u8[8192]{0}', space=vmem, size = 0x2000, scoped, tag = 'input window, operand 1, single buffered']
    #allocation6 [shape = 's32[1]{0}', space=sflag, size = 0x4, scoped, tag = 'scoped memory for mha_pallas.1']
    #allocation7 [shape = 'u8[8192]{0}', space=vmem, size = 0x2000, scoped, tag = 'input window, operand 2, single buffered']
    #allocation8 [shape = 'u8[8192]{0}', space=vmem, size = 0x2000, scoped, tag = 'output window, operand 0']
    %9 = vsyncpa [#allocation3], 0
    %s10 = scalar_lea.sflag [#allocation3], 1
    %11 = vsyncpa %s10, 0
    %12 = vsyncpa [#allocation6], 0
    %13 = vsyncpa [#allocation4], 0
    %s14 = scalar_lea.sflag [#allocation4], 1
    %15 = vsyncpa %s14, 0
    loop: start=0, step=1, limit=4
    $region2: #{mha_pallas.1} parent=1 // loop_pre_header
      _
    $region3: #{mha_pallas.1} parent=1 // loop_header
      %s17 = sphi 0, %s21
      %p18 = scmp.ge.s32.totalorder %s17, 4
      %s27 = sphi 0, %s29
      %s30 = sphi 0, %s27
      %s31 = sphi 0, %s30
      %s47 = sphi 0, %s31
      %s51 = sphi 0, %s51
      %s53 = sphi 0, %s51
      %s54 = sphi 0, %s53
      %s68 = sphi 0, %s54
      %s72 = sphi 0, %s72
      %s74 = sphi 0, %s72
      %s75 = sphi 0, %s74
      %s89 = sphi 0, %s75
      %s93 = sphi 0, %s93
      %s95 = sphi 0, %s93
      %s96 = sphi 0, %s95
      %s110 = sphi 0, %s96
      %s116 = sphi 0, %s118
      %s119 = sphi 0, %s116
      %s120 = sphi 0, %s119
      %s136 = sphi 0, %s120
    $region4: #{mha_pallas.1} parent=1 // loop_header_branch
      %20 = sbr.rel (%p18) target = $region8
    $region5: #{mha_pallas.1} parent=1 // loop_body
      %s22 = ssub.s32 %s17, 1
      %s23 = ssub.s32 %s17, 2
      %s24 = sadd.s32 %s17, 1
      %s25 = ssub.s32 %s17, %s24
      %p26 = scmp.eq.s32.totalorder %s25, 0
      %s28 = sadd.s32 %s27, 1
      %s29 = scalar_select %p26, %s27, %s28
      %p32 = pneg %p26
      %p33 = scmp.eq.s32.totalorder %s17, 1
      %p34 = por %p32, %p33
      %p35 = scmp.ne.s32.totalorder %s27, %s30
      %p36 = scmp.eq.s32.totalorder %s17, 0
      %p37 = por %p35, %p36
      %p38 = scmp.ne.s32.totalorder %s27, %s30
      %p39 = scmp.eq.s32.totalorder %s22, 1
      %p40 = por %p38, %p39
      %p41 = scmp.ne.s32.totalorder %s30, %s31
      %p42 = scmp.eq.s32.totalorder %s22, 0
      %p43 = por %p41, %p42
      %p44 = scmp.ne.s32.totalorder %s30, %s31
      %p45 = scmp.eq.s32.totalorder %s23, 1
      %p46 = por %p44, %p45
      %p48 = scmp.ne.s32.totalorder %s31, %s47
      %p49 = scmp.eq.s32.totalorder %s23, 0
      %p50 = por %p48, %p49
      %s52 = sadd.s32 %s51, 1
      %p55 = scmp.eq.s32.totalorder %s17, 1
      %p56 = scmp.ne.s32.totalorder %s51, %s53
      %p57 = scmp.eq.s32.totalorder %s17, 0
      %p58 = por %p56, %p57
      %p59 = scmp.ne.s32.totalorder %s51, %s53
      %p60 = scmp.eq.s32.totalorder %s22, 1
      %p61 = por %p59, %p60
      %p62 = scmp.ne.s32.totalorder %s53, %s54
      %p63 = scmp.eq.s32.totalorder %s22, 0
      %p64 = por %p62, %p63
      %p65 = scmp.ne.s32.totalorder %s53, %s54
      %p66 = scmp.eq.s32.totalorder %s23, 1
      %p67 = por %p65, %p66
      %p69 = scmp.ne.s32.totalorder %s54, %s68
      %p70 = scmp.eq.s32.totalorder %s23, 0
      %p71 = por %p69, %p70
      %s73 = sadd.s32 %s72, 1
      %p76 = scmp.eq.s32.totalorder %s17, 1
      %p77 = scmp.ne.s32.totalorder %s72, %s74
      %p78 = scmp.eq.s32.totalorder %s17, 0
      %p79 = por %p77, %p78
      %p80 = scmp.ne.s32.totalorder %s72, %s74
      %p81 = scmp.eq.s32.totalorder %s22, 1
      %p82 = por %p80, %p81
      %p83 = scmp.ne.s32.totalorder %s74, %s75
      %p84 = scmp.eq.s32.totalorder %s22, 0
      %p85 = por %p83, %p84
      %p86 = scmp.ne.s32.totalorder %s74, %s75
      %p87 = scmp.eq.s32.totalorder %s23, 1
      %p88 = por %p86, %p87
      %p90 = scmp.ne.s32.totalorder %s75, %s89
      %p91 = scmp.eq.s32.totalorder %s23, 0
      %p92 = por %p90, %p91
      %s94 = sadd.s32 %s93, 1
      %p97 = scmp.eq.s32.totalorder %s17, 1
      %p98 = scmp.ne.s32.totalorder %s93, %s95
      %p99 = scmp.eq.s32.totalorder %s17, 0
      %p100 = por %p98, %p99
      %p101 = scmp.ne.s32.totalorder %s93, %s95
      %p102 = scmp.eq.s32.totalorder %s22, 1
      %p103 = por %p101, %p102
      %p104 = scmp.ne.s32.totalorder %s95, %s96
      %p105 = scmp.eq.s32.totalorder %s22, 0
      %p106 = por %p104, %p105
      %p107 = scmp.ne.s32.totalorder %s95, %s96
      %p108 = scmp.eq.s32.totalorder %s23, 1
      %p109 = por %p107, %p108
      %p111 = scmp.ne.s32.totalorder %s96, %s110
      %p112 = scmp.eq.s32.totalorder %s23, 0
      %p113 = por %p111, %p112
      %s114 = ssub.s32 %s17, %s24
      %p115 = scmp.eq.s32.totalorder %s114, 0
      %s117 = sadd.s32 %s116, 1
      %s118 = scalar_select %p115, %s116, %s117
      %p121 = pneg %p115
      %p122 = scmp.eq.s32.totalorder %s17, 1
      %p123 = por %p121, %p122
      %p124 = scmp.ne.s32.totalorder %s116, %s119
      %p125 = scmp.eq.s32.totalorder %s17, 0
      %p126 = por %p124, %p125
      %p127 = scmp.ne.s32.totalorder %s116, %s119
      %p128 = scmp.eq.s32.totalorder %s22, 1
      %p129 = por %p127, %p128
      %p130 = scmp.ne.s32.totalorder %s119, %s120
      %p131 = scmp.eq.s32.totalorder %s22, 0
      %p132 = por %p130, %p131
      %p133 = scmp.ne.s32.totalorder %s119, %s120
      %p134 = scmp.eq.s32.totalorder %s23, 1
      %p135 = por %p133, %p134
      %p137 = scmp.ne.s32.totalorder %s120, %s136
      %p138 = scmp.eq.s32.totalorder %s23, 0
      %p139 = por %p137, %p138
      %p140 = scmp.le.s32.totalorder 1, %s17
      %p141 = scmp.lt.s32.totalorder %s17, 3
      %p142 = pnand %p140, %p141
      %p143 = pneg %p142
      // Predicated region
      $region9: #{mha_pallas.1} parent=5 // pred_check
        _
      $region10: #{mha_pallas.1} parent=5 // pred_check_branch
        %145 = sbr.rel (%p142) target = $region12
      $region11: #{mha_pallas.1} parent=5 // pred_region
        %s146 = ssub.s32 %s17, 1
        // Predicated region
        $region13: #{mha_pallas.1} parent=11 // pred_check
          %p147 = pneg %p64
        $region14: #{mha_pallas.1} parent=11 // pred_check_branch
          %149 = sbr.rel (%p147) target = $region16
        $region15: #{mha_pallas.1} parent=11 // pred_region
          %s151 = ssub.s32 256, 256
          %152 = vsyncadd [#allocation6], %s151
          %s153 = sshll.u32 [#allocation5], 4
          %s154 = int_to_ptr.vmem [resolvable:$true] %s153
          %159 = dma.hbm_to_vmem [thread:$0]  %s1, 256, %s154, [#allocation6], 64, 64, 4
        $region16: #{mha_pallas.1} parent=11 // pred_fallthru
          _
        // Predicated region
        $region17: #{mha_pallas.1} parent=11 // pred_check
          %p160 = pneg %p85
        $region18: #{mha_pallas.1} parent=11 // pred_check_branch
          %162 = sbr.rel (%p160) target = $region20
        $region19: #{mha_pallas.1} parent=11 // pred_region
          %s164 = ssub.s32 256, 256
          %165 = vsyncadd [#allocation6], %s164
          %s166 = sshll.u32 [#allocation7], 4
          %s167 = int_to_ptr.vmem [resolvable:$true] %s166
          %172 = dma.hbm_to_vmem [thread:$0]  %s2, 256, %s167, [#allocation6], 64, 64, 4
        $region20: #{mha_pallas.1} parent=11 // pred_fallthru
          _
        // Predicated region
        $region21: #{mha_pallas.1} parent=11 // pred_check
          %p173 = pneg %p106
        $region22: #{mha_pallas.1} parent=11 // pred_check_branch
          %175 = sbr.rel (%p173) target = $region24
        $region23: #{mha_pallas.1} parent=11 // pred_region
          _
        $region24: #{mha_pallas.1} parent=11 // pred_fallthru
          _
      $region12: #{mha_pallas.1} parent=5 // pred_fallthru
        _
      %p176 = scmp.lt.s32.totalorder %s17, 2
      // Predicated region
      $region25: #{mha_pallas.1} parent=5 // pred_check
        %p177 = pneg %p176
      $region26: #{mha_pallas.1} parent=5 // pred_check_branch
        %179 = sbr.rel (%p177) target = $region28
      $region27: #{mha_pallas.1} parent=5 // pred_region
        // Predicated region
        $region29: #{mha_pallas.1} parent=27 // pred_check
          %p180 = pneg %p37
        $region30: #{mha_pallas.1} parent=27 // pred_check_branch
          %182 = sbr.rel (%p180) target = $region32
        $region31: #{mha_pallas.1} parent=27 // pred_region
          %s183 = sand.u32 %s27, 1
          %s184 = scalar_lea.sflag [#allocation3], %s183
          %s185 = sand.u32 %s27, 1
          %s186 = smul.addr %s185, 8
          %s187 = scalar_lea.vmem [#allocation2], %s186
          %s189 = ssub.s32 128, 128
          %190 = vsyncadd %s184, %s189
          %s191 = smul.addr %s17, 128
          %s192 = scalar_lea.hbm %s0, %s191
          %s194 = sshll.u32 %s187, 4
          %s195 = int_to_ptr.vmem [resolvable:$true] %s194
          %197 = dma.hbm_to_vmem [thread:$0]  %s192, 128, %s195, %s184
        $region32: #{mha_pallas.1} parent=27 // pred_fallthru
          _
      $region28: #{mha_pallas.1} parent=5 // pred_fallthru
        _
      %p198 = scmp.le.s32.totalorder 1, %s17
      %p199 = scmp.lt.s32.totalorder %s17, 3
      %p200 = pnand %p198, %p199
      %p201 = pneg %p200
      // Predicated region
      $region33: #{mha_pallas.1} parent=5 // pred_check
        _
      $region34: #{mha_pallas.1} parent=5 // pred_check_branch
        %203 = sbr.rel (%p200) target = $region36
      $region35: #{mha_pallas.1} parent=5 // pred_region
        %s204 = ssub.s32 %s17, 1
        %s205 = sand.u32 %s30, 1
        %s206 = scalar_lea.sflag [#allocation3], %s205
        %s207 = sand.u32 %s30, 1
        %s208 = smul.addr %s207, 8
        %s209 = scalar_lea.vmem [#allocation2], %s208
        // Predicated region
        $region37: #{mha_pallas.1} parent=35 // pred_check
          %p210 = pneg %p43
        $region38: #{mha_pallas.1} parent=35 // pred_check_branch
          %212 = sbr.rel (%p210) target = $region40
        $region39: #{mha_pallas.1} parent=35 // pred_region
          %213 = dma.done %s206, 128
        $region40: #{mha_pallas.1} parent=35 // pred_fallthru
          _
        // Predicated region
        $region41: #{mha_pallas.1} parent=35 // pred_check
          %p214 = pneg %p64
        $region42: #{mha_pallas.1} parent=35 // pred_check_branch
          %216 = sbr.rel (%p214) target = $region44
        $region43: #{mha_pallas.1} parent=35 // pred_region
          %217 = dma.done [#allocation6], 256
        $region44: #{mha_pallas.1} parent=35 // pred_fallthru
          _
        // Predicated region
        $region45: #{mha_pallas.1} parent=35 // pred_check
          %p218 = pneg %p85
        $region46: #{mha_pallas.1} parent=35 // pred_check_branch
          %220 = sbr.rel (%p218) target = $region48
        $region47: #{mha_pallas.1} parent=35 // pred_region
          %221 = dma.done [#allocation6], 256
        $region48: #{mha_pallas.1} parent=35 // pred_fallthru
          _
        %s222 = sand.u32 %s30, 1
        %s223 = scalar_lea.sflag [#allocation3], %s222
        %s224 = sand.u32 %s30, 1
        %s225 = smul.addr %s224, 8
        %s226 = scalar_lea.vmem [#allocation2], %s225
        %p227 = pneg %p43
        %p228 = pneg %p40
        %p229 = pneg %p64
        %p230 = pneg %p61
        %p231 = pneg %p85
        %p232 = pneg %p82
        %p233 = pneg %p106
        %p234 = pneg %p103
        %p235 = pneg %p132
        %p236 = pneg %p129
        %s237 = sand.u32 %s119, 1
        %s238 = scalar_lea.sflag [#allocation4], %s237
        %s239 = sand.u32 %s119, 1
        %s240 = smul.addr %s239, 8
        %s241 = scalar_lea.vmem [#allocation8], %s240
        %v243 = vld [vmem:[%s209] sm:$0xff]
        %v244 = vpack.c.bf16 %v243, %v243
        %v245 = vld [vmem:[#allocation5] sm:$0xf]
        %v246 = vld [vmem:[#allocation5 + $0x4] sm:$0xf]
        %v247 = vld [vmem:[#allocation5 + $0x8] sm:$0xf]
        %v248 = vld [vmem:[#allocation5 + $0xc] sm:$0xf]
        %v253 = vunpack.c.l.b16 %v245
        %v254 = vunpack.c.l.b16 %v246
        %v255 = vunpack.c.l.b16 %v247
        %v256 = vunpack.c.l.b16 %v248
        %v257 = vpack.c.b16 %v254, %v253
        %v258 = vpack.c.b16 %v256, %v255
        %vm261 = vcmask 261120
        %v263 = vsel %vm261, %v244, 0
        %265 = vmatprep.subr.bf16.mxu0 0
        %266 = vmatpush1.bf16.msra.mxu0 0
        %267 = vmatprep.subr.bf16.mxu0 0
        %268 = vmatpush1.bf16.msra.mxu0 0
        %269 = vmatprep.subr.bf16.mxu0 0
        %270 = vmatpush1.bf16.msra.mxu0 0
        %271 = vmatprep.subr.bf16.mxu0 0
        %272 = vmatpush1.bf16.msra.mxu0 0
        %273 = vmatprep.subr.bf16.mxu0 0
        %274 = vmatpush1.bf16.msra.mxu0 0
        %275 = vmatprep.subr.bf16.mxu0 0
        %276 = vmatpush1.bf16.msra.mxu0 0
        %277 = vmatprep.subr.bf16.mxu0 0
        %278 = vmatpush1.bf16.msra.mxu0 %v258
        %279 = vmatprep.subr.bf16.mxu0 0
        %280 = vmatpush1.bf16.msra.mxu0 %v257
        %281 = vmatprep.subr.bf16.mxu0 0
        %282 = vmatpush2.bf16.msra.mxu0 0
        %283 = vmatprep.subr.bf16.mxu0 0
        %284 = vmatpush2.bf16.msra.mxu0 0
        %285 = vmatprep.subr.bf16.mxu0 0
        %286 = vmatpush2.bf16.msra.mxu0 0
        %287 = vmatprep.subr.bf16.mxu0 0
        %288 = vmatpush2.bf16.msra.mxu0 0
        %289 = vmatprep.subr.bf16.mxu0 0
        %290 = vmatpush2.bf16.msra.mxu0 0
        %291 = vmatprep.subr.bf16.mxu0 0
        %292 = vmatpush2.bf16.msra.mxu0 0
        %293 = vmatprep.subr.bf16.mxu0 0
        %294 = vmatpush2.bf16.msra.mxu0 0
        %295 = vmatprep.subr.bf16.mxu0 0
        %296 = vmatpush2.bf16.msra.mxu0 0
        %297 = vmatprep.mubr.bf16.mxu0 0
        %298 = vmatmul.mubr.bf16.gmra.mxu0 %v263
        %v299 = vpop.f32.mrf.mxu0
        %v300 = vadd.f32 0.0, %v299
        %v301 = vpop.f32.mrf.mxu0
        %v302 = vpop.f32.mrf.mxu0
        %v303 = vpop.f32.mrf.mxu0
        %304 = vdwg.mxu0
        %v305 = vlaneseq
        %v306 = vshrl.u32 %v305, 7
        %v307 = vlaneseq
        %v308 = vand.u32 %v307, 127
        %vm309 = vcmp.ge.s32.totalorder %v306, %v308
        %v310 = vsel %vm309, 0.0, -1e+30
        %v311 = vpack.c.bf16 %v300, %v300
        %313 = vrot.lane.b32.xlu0 %v311, 96
        %v314 = vpop.permute.xlu0 %313
        %vm315 = vcmask 64512
        %v317 = vsel %vm315, %v311, 0
        %v320 = vsel %vm315, %v314, 0
        %322 = vmatprep.subr.bf16.mxu0 0
        %323 = vmatpush1.bf16.xpose.msra.mxu0 0
        %324 = vmatprep.subr.bf16.mxu0 0
        %325 = vmatpush1.bf16.xpose.msra.mxu0 0
        %326 = vmatprep.subr.bf16.mxu0 0
        %327 = vmatpush1.bf16.xpose.msra.mxu0 0
        %328 = vmatprep.subr.bf16.mxu0 0
        %329 = vmatpush1.bf16.xpose.msra.mxu0 0
        %330 = vmatprep.subr.bf16.mxu0 0
        %331 = vmatpush1.bf16.xpose.msra.mxu0 0
        %332 = vmatprep.subr.bf16.mxu0 0
        %333 = vmatpush1.bf16.xpose.msra.mxu0 0
        %334 = vmatprep.subr.bf16.mxu0 0
        %335 = vmatpush1.bf16.xpose.msra.mxu0 0
        %336 = vmatprep.subr.bf16.mxu0 0
        %337 = vmatpush1.bf16.xpose.msra.mxu0 %v320
        %338 = vmatprep.subr.bf16.mxu0 0
        %339 = vmatpush2.bf16.xpose.msra.mxu0 0
        %340 = vmatprep.subr.bf16.mxu0 0
        %341 = vmatpush2.bf16.xpose.msra.mxu0 0
        %342 = vmatprep.subr.bf16.mxu0 0
        %343 = vmatpush2.bf16.xpose.msra.mxu0 0
        %344 = vmatprep.subr.bf16.mxu0 0
        %345 = vmatpush2.bf16.xpose.msra.mxu0 0
        %346 = vmatprep.subr.bf16.mxu0 0
        %347 = vmatpush2.bf16.xpose.msra.mxu0 0
        %348 = vmatprep.subr.bf16.mxu0 0
        %349 = vmatpush2.bf16.xpose.msra.mxu0 0
        %350 = vmatprep.subr.bf16.mxu0 0
        %351 = vmatpush2.bf16.xpose.msra.mxu0 0
        %352 = vmatprep.subr.bf16.mxu0 0
        %353 = vmatpush2.bf16.xpose.msra.mxu0 0
        %354 = vmatprep.mubr.bf16.mxu0 0
        %355 = vmatmul.mubr.bf16.gmra.mxu0 %v317
        %v356 = vpop.f32.mrf.mxu0
        %v357 = vadd.f32 %v310, %v356
        %v358 = vpop.f32.mrf.mxu0
        %v359 = vpop.f32.mrf.mxu0
        %v360 = vpop.f32.mrf.mxu0
        %361 = vdwg.mxu0
        %v362 = vsel %vm315, %v357, -inf
        %363 = vmax.xlane.f32.xlu0 %v362
        %v364 = vpop.xlane.xlu0 %363
        %v365 = vsub.f32 %v357, %v364
        %v366 = vmul.f32 %v365, 1.442695
        %v367 = vpow.pop %v366
        %v368 = vsel %vm315, %v367, 0.0
        %369 = vadd.xlane.f32.xlu0 %v368
        %v370 = vpop.xlane.xlu0 %369
        %v371 = vrcp.pop %v370
        %v372 = vmul.f32 %v367, %v371
        %v373 = vpack.c.bf16 %v372, %v372
        %374 = vrot.lane.b32.xlu0 %v311, 64
        %v375 = vpop.permute.xlu0 %374
        %v377 = vsel %vm315, %v373, 0
        %vm379 = vcmask 1043456
        %v381 = vsel %vm379, %v375, 0
        %383 = vmatprep.subr.bf16.mxu0 0
        %384 = vmatpush1.bf16.msra.mxu0 0
        %385 = vmatprep.subr.bf16.mxu0 0
        %386 = vmatpush1.bf16.msra.mxu0 0
        %387 = vmatprep.subr.bf16.mxu0 0
        %388 = vmatpush1.bf16.msra.mxu0 0
        %389 = vmatprep.subr.bf16.mxu0 0
        %390 = vmatpush1.bf16.msra.mxu0 0
        %391 = vmatprep.subr.bf16.mxu0 0
        %392 = vmatpush1.bf16.msra.mxu0 0
        %393 = vmatprep.subr.bf16.mxu0 0
        %394 = vmatpush1.bf16.msra.mxu0 0
        %395 = vmatprep.subr.bf16.mxu0 0
        %396 = vmatpush1.bf16.msra.mxu0 0
        %397 = vmatprep.subr.bf16.mxu0 0
        %398 = vmatpush1.bf16.msra.mxu0 %v381
        %399 = vmatprep.subr.bf16.mxu0 0
        %400 = vmatpush2.bf16.msra.mxu0 0
        %401 = vmatprep.subr.bf16.mxu0 0
        %402 = vmatpush2.bf16.msra.mxu0 0
        %403 = vmatprep.subr.bf16.mxu0 0
        %404 = vmatpush2.bf16.msra.mxu0 0
        %405 = vmatprep.subr.bf16.mxu0 0
        %406 = vmatpush2.bf16.msra.mxu0 0
        %407 = vmatprep.subr.bf16.mxu0 0
        %408 = vmatpush2.bf16.msra.mxu0 0
        %409 = vmatprep.subr.bf16.mxu0 0
        %410 = vmatpush2.bf16.msra.mxu0 0
        %411 = vmatprep.subr.bf16.mxu0 0
        %412 = vmatpush2.bf16.msra.mxu0 0
        %413 = vmatprep.subr.bf16.mxu0 0
        %414 = vmatpush2.bf16.msra.mxu0 0
        %415 = vmatprep.mubr.bf16.mxu0 0
        %416 = vmatmul.mubr.bf16.gmra.mxu0 %v377
        %v417 = vpop.f32.mrf.mxu0
        %v418 = vadd.f32 0.0, %v417
        %v419 = vpop.f32.mrf.mxu0
        %v420 = vpop.f32.mrf.mxu0
        %v421 = vpop.f32.mrf.mxu0
        %422 = vdwg.mxu0
        %423 = vrot.lane.b32.xlu0 %v311, 120
        %v424 = vpop.permute.xlu0 %423
        %425 = vrot.lane.b32.xlu0 %v311, 88
        %v426 = vpop.permute.xlu0 %425
        %v428 = vsel %vm315, %v424, 0
        %v431 = vsel %vm315, %v426, 0
        %433 = vmatprep.subr.bf16.mxu0 0
        %434 = vmatpush1.bf16.xpose.msra.mxu0 0
        %435 = vmatprep.subr.bf16.mxu0 0
        %436 = vmatpush1.bf16.xpose.msra.mxu0 0
        %437 = vmatprep.subr.bf16.mxu0 0
        %438 = vmatpush1.bf16.xpose.msra.mxu0 0
        %439 = vmatprep.subr.bf16.mxu0 0
        %440 = vmatpush1.bf16.xpose.msra.mxu0 0
        %441 = vmatprep.subr.bf16.mxu0 0
        %442 = vmatpush1.bf16.xpose.msra.mxu0 0
        %443 = vmatprep.subr.bf16.mxu0 0
        %444 = vmatpush1.bf16.xpose.msra.mxu0 0
        %445 = vmatprep.subr.bf16.mxu0 0
        %446 = vmatpush1.bf16.xpose.msra.mxu0 0
        %447 = vmatprep.subr.bf16.mxu0 0
        %448 = vmatpush1.bf16.xpose.msra.mxu0 %v431
        %449 = vmatprep.subr.bf16.mxu0 0
        %450 = vmatpush2.bf16.xpose.msra.mxu0 0
        %451 = vmatprep.subr.bf16.mxu0 0
        %452 = vmatpush2.bf16.xpose.msra.mxu0 0
        %453 = vmatprep.subr.bf16.mxu0 0
        %454 = vmatpush2.bf16.xpose.msra.mxu0 0
        %455 = vmatprep.subr.bf16.mxu0 0
        %456 = vmatpush2.bf16.xpose.msra.mxu0 0
        %457 = vmatprep.subr.bf16.mxu0 0
        %458 = vmatpush2.bf16.xpose.msra.mxu0 0
        %459 = vmatprep.subr.bf16.mxu0 0
        %460 = vmatpush2.bf16.xpose.msra.mxu0 0
        %461 = vmatprep.subr.bf16.mxu0 0
        %462 = vmatpush2.bf16.xpose.msra.mxu0 0
        %463 = vmatprep.subr.bf16.mxu0 0
        %464 = vmatpush2.bf16.xpose.msra.mxu0 0
        %465 = vmatprep.mubr.bf16.mxu0 0
        %466 = vmatmul.mubr.bf16.gmra.mxu0 %v428
        %v467 = vpop.f32.mrf.mxu0
        %v468 = vadd.f32 %v310, %v467
        %v469 = vpop.f32.mrf.mxu0
        %v470 = vpop.f32.mrf.mxu0
        %v471 = vpop.f32.mrf.mxu0
        %472 = vdwg.mxu0
        %v473 = vsel %vm315, %v468, -inf
        %474 = vmax.xlane.f32.xlu0 %v473
        %v475 = vpop.xlane.xlu0 %474
        %v476 = vsub.f32 %v468, %v475
        %v477 = vmul.f32 %v476, 1.442695
        %v478 = vpow.pop %v477
        %v479 = vsel %vm315, %v478, 0.0
        %480 = vadd.xlane.f32.xlu0 %v479
        %v481 = vpop.xlane.xlu0 %480
        %v482 = vrcp.pop %v481
        %v483 = vmul.f32 %v478, %v482
        %v484 = vpack.c.bf16 %v483, %v483
        %485 = vrot.lane.b32.xlu0 %v311, 56
        %v486 = vpop.permute.xlu0 %485
        %v488 = vsel %vm315, %v484, 0
        %v491 = vsel %vm379, %v486, 0
        %493 = vmatprep.subr.bf16.mxu0 0
        %494 = vmatpush1.bf16.msra.mxu0 0
        %495 = vmatprep.subr.bf16.mxu0 0
        %496 = vmatpush1.bf16.msra.mxu0 0
        %497 = vmatprep.subr.bf16.mxu0 0
        %498 = vmatpush1.bf16.msra.mxu0 0
        %499 = vmatprep.subr.bf16.mxu0 0
        %500 = vmatpush1.bf16.msra.mxu0 0
        %501 = vmatprep.subr.bf16.mxu0 0
        %502 = vmatpush1.bf16.msra.mxu0 0
        %503 = vmatprep.subr.bf16.mxu0 0
        %504 = vmatpush1.bf16.msra.mxu0 0
        %505 = vmatprep.subr.bf16.mxu0 0
        %506 = vmatpush1.bf16.msra.mxu0 0
        %507 = vmatprep.subr.bf16.mxu0 0
        %508 = vmatpush1.bf16.msra.mxu0 %v491
        %509 = vmatprep.subr.bf16.mxu0 0
        %510 = vmatpush2.bf16.msra.mxu0 0
        %511 = vmatprep.subr.bf16.mxu0 0
        %512 = vmatpush2.bf16.msra.mxu0 0
        %513 = vmatprep.subr.bf16.mxu0 0
        %514 = vmatpush2.bf16.msra.mxu0 0
        %515 = vmatprep.subr.bf16.mxu0 0
        %516 = vmatpush2.bf16.msra.mxu0 0
        %517 = vmatprep.subr.bf16.mxu0 0
        %518 = vmatpush2.bf16.msra.mxu0 0
        %519 = vmatprep.subr.bf16.mxu0 0
        %520 = vmatpush2.bf16.msra.mxu0 0
        %521 = vmatprep.subr.bf16.mxu0 0
        %522 = vmatpush2.bf16.msra.mxu0 0
        %523 = vmatprep.subr.bf16.mxu0 0
        %524 = vmatpush2.bf16.msra.mxu0 0
        %525 = vmatprep.mubr.bf16.mxu0 0
        %526 = vmatmul.mubr.bf16.gmra.mxu0 %v488
        %v527 = vpop.f32.mrf.mxu0
        %v528 = vadd.f32 0.0, %v527
        %v529 = vpop.f32.mrf.mxu0
        %v530 = vpop.f32.mrf.mxu0
        %v531 = vpop.f32.mrf.mxu0
        %532 = vdwg.mxu0
        %533 = vrot.lane.b32.xlu0 %v311, 112
        %v534 = vpop.permute.xlu0 %533
        %535 = vrot.lane.b32.xlu0 %v311, 80
        %v536 = vpop.permute.xlu0 %535
        %v538 = vsel %vm315, %v534, 0
        %v541 = vsel %vm315, %v536, 0
        %543 = vmatprep.subr.bf16.mxu0 0
        %544 = vmatpush1.bf16.xpose.msra.mxu0 0
        %545 = vmatprep.subr.bf16.mxu0 0
        %546 = vmatpush1.bf16.xpose.msra.mxu0 0
        %547 = vmatprep.subr.bf16.mxu0 0
        %548 = vmatpush1.bf16.xpose.msra.mxu0 0
        %549 = vmatprep.subr.bf16.mxu0 0
        %550 = vmatpush1.bf16.xpose.msra.mxu0 0
        %551 = vmatprep.subr.bf16.mxu0 0
        %552 = vmatpush1.bf16.xpose.msra.mxu0 0
        %553 = vmatprep.subr.bf16.mxu0 0
        %554 = vmatpush1.bf16.xpose.msra.mxu0 0
        %555 = vmatprep.subr.bf16.mxu0 0
        %556 = vmatpush1.bf16.xpose.msra.mxu0 0
        %557 = vmatprep.subr.bf16.mxu0 0
        %558 = vmatpush1.bf16.xpose.msra.mxu0 %v541
        %559 = vmatprep.subr.bf16.mxu0 0
        %560 = vmatpush2.bf16.xpose.msra.mxu0 0
        %561 = vmatprep.subr.bf16.mxu0 0
        %562 = vmatpush2.bf16.xpose.msra.mxu0 0
        %563 = vmatprep.subr.bf16.mxu0 0
        %564 = vmatpush2.bf16.xpose.msra.mxu0 0
        %565 = vmatprep.subr.bf16.mxu0 0
        %566 = vmatpush2.bf16.xpose.msra.mxu0 0
        %567 = vmatprep.subr.bf16.mxu0 0
        %568 = vmatpush2.bf16.xpose.msra.mxu0 0
        %569 = vmatprep.subr.bf16.mxu0 0
        %570 = vmatpush2.bf16.xpose.msra.mxu0 0
        %571 = vmatprep.subr.bf16.mxu0 0
        %572 = vmatpush2.bf16.xpose.msra.mxu0 0
        %573 = vmatprep.subr.bf16.mxu0 0
        %574 = vmatpush2.bf16.xpose.msra.mxu0 0
        %575 = vmatprep.mubr.bf16.mxu0 0
        %576 = vmatmul.mubr.bf16.gmra.mxu0 %v538
        %v577 = vpop.f32.mrf.mxu0
        %v578 = vadd.f32 %v310, %v577
        %v579 = vpop.f32.mrf.mxu0
        %v580 = vpop.f32.mrf.mxu0
        %v581 = vpop.f32.mrf.mxu0
        %582 = vdwg.mxu0
        %v583 = vsel %vm315, %v578, -inf
        %584 = vmax.xlane.f32.xlu0 %v583
        %v585 = vpop.xlane.xlu0 %584
        %v586 = vsub.f32 %v578, %v585
        %v587 = vmul.f32 %v586, 1.442695
        %v588 = vpow.pop %v587
        %v589 = vsel %vm315, %v588, 0.0
        %590 = vadd.xlane.f32.xlu0 %v589
        %v591 = vpop.xlane.xlu0 %590
        %v592 = vrcp.pop %v591
        %v593 = vmul.f32 %v588, %v592
        %v594 = vpack.c.bf16 %v593, %v593
        %595 = vrot.lane.b32.xlu0 %v311, 48
        %v596 = vpop.permute.xlu0 %595
        %v598 = vsel %vm315, %v594, 0
        %v601 = vsel %vm379, %v596, 0
        %603 = vmatprep.subr.bf16.mxu0 0
        %604 = vmatpush1.bf16.msra.mxu0 0
        %605 = vmatprep.subr.bf16.mxu0 0
        %606 = vmatpush1.bf16.msra.mxu0 0
        %607 = vmatprep.subr.bf16.mxu0 0
        %608 = vmatpush1.bf16.msra.mxu0 0
        %609 = vmatprep.subr.bf16.mxu0 0
        %610 = vmatpush1.bf16.msra.mxu0 0
        %611 = vmatprep.subr.bf16.mxu0 0
        %612 = vmatpush1.bf16.msra.mxu0 0
        %613 = vmatprep.subr.bf16.mxu0 0
        %614 = vmatpush1.bf16.msra.mxu0 0
        %615 = vmatprep.subr.bf16.mxu0 0
        %616 = vmatpush1.bf16.msra.mxu0 0
        %617 = vmatprep.subr.bf16.mxu0 0
        %618 = vmatpush1.bf16.msra.mxu0 %v601
        %619 = vmatprep.subr.bf16.mxu0 0
        %620 = vmatpush2.bf16.msra.mxu0 0
        %621 = vmatprep.subr.bf16.mxu0 0
        %622 = vmatpush2.bf16.msra.mxu0 0
        %623 = vmatprep.subr.bf16.mxu0 0
        %624 = vmatpush2.bf16.msra.mxu0 0
        %625 = vmatprep.subr.bf16.mxu0 0
        %626 = vmatpush2.bf16.msra.mxu0 0
        %627 = vmatprep.subr.bf16.mxu0 0
        %628 = vmatpush2.bf16.msra.mxu0 0
        %629 = vmatprep.subr.bf16.mxu0 0
        %630 = vmatpush2.bf16.msra.mxu0 0
        %631 = vmatprep.subr.bf16.mxu0 0
        %632 = vmatpush2.bf16.msra.mxu0 0
        %633 = vmatprep.subr.bf16.mxu0 0
        %634 = vmatpush2.bf16.msra.mxu0 0
        %635 = vmatprep.mubr.bf16.mxu0 0
        %636 = vmatmul.mubr.bf16.gmra.mxu0 %v598
        %v637 = vpop.f32.mrf.mxu0
        %v638 = vadd.f32 0.0, %v637
        %v639 = vpop.f32.mrf.mxu0
        %v640 = vpop.f32.mrf.mxu0
        %v641 = vpop.f32.mrf.mxu0
        %642 = vdwg.mxu0
        %643 = vrot.lane.b32.xlu0 %v311, 104
        %v644 = vpop.permute.xlu0 %643
        %645 = vrot.lane.b32.xlu0 %v311, 72
        %v646 = vpop.permute.xlu0 %645
        %v648 = vsel %vm315, %v644, 0
        %v651 = vsel %vm315, %v646, 0
        %653 = vmatprep.subr.bf16.mxu0 0
        %654 = vmatpush1.bf16.xpose.msra.mxu0 0
        %655 = vmatprep.subr.bf16.mxu0 0
        %656 = vmatpush1.bf16.xpose.msra.mxu0 0
        %657 = vmatprep.subr.bf16.mxu0 0
        %658 = vmatpush1.bf16.xpose.msra.mxu0 0
        %659 = vmatprep.subr.bf16.mxu0 0
        %660 = vmatpush1.bf16.xpose.msra.mxu0 0
        %661 = vmatprep.subr.bf16.mxu0 0
        %662 = vmatpush1.bf16.xpose.msra.mxu0 0
        %663 = vmatprep.subr.bf16.mxu0 0
        %664 = vmatpush1.bf16.xpose.msra.mxu0 0
        %665 = vmatprep.subr.bf16.mxu0 0
        %666 = vmatpush1.bf16.xpose.msra.mxu0 0
        %667 = vmatprep.subr.bf16.mxu0 0
        %668 = vmatpush1.bf16.xpose.msra.mxu0 %v651
        %669 = vmatprep.subr.bf16.mxu0 0
        %670 = vmatpush2.bf16.xpose.msra.mxu0 0
        %671 = vmatprep.subr.bf16.mxu0 0
        %672 = vmatpush2.bf16.xpose.msra.mxu0 0
        %673 = vmatprep.subr.bf16.mxu0 0
        %674 = vmatpush2.bf16.xpose.msra.mxu0 0
        %675 = vmatprep.subr.bf16.mxu0 0
        %676 = vmatpush2.bf16.xpose.msra.mxu0 0
        %677 = vmatprep.subr.bf16.mxu0 0
        %678 = vmatpush2.bf16.xpose.msra.mxu0 0
        %679 = vmatprep.subr.bf16.mxu0 0
        %680 = vmatpush2.bf16.xpose.msra.mxu0 0
        %681 = vmatprep.subr.bf16.mxu0 0
        %682 = vmatpush2.bf16.xpose.msra.mxu0 0
        %683 = vmatprep.subr.bf16.mxu0 0
        %684 = vmatpush2.bf16.xpose.msra.mxu0 0
        %685 = vmatprep.mubr.bf16.mxu0 0
        %686 = vmatmul.mubr.bf16.gmra.mxu0 %v648
        %v687 = vpop.f32.mrf.mxu0
        %v688 = vadd.f32 %v310, %v687
        %v689 = vpop.f32.mrf.mxu0
        %v690 = vpop.f32.mrf.mxu0
        %v691 = vpop.f32.mrf.mxu0
        %692 = vdwg.mxu0
        %v693 = vsel %vm315, %v688, -inf
        %694 = vmax.xlane.f32.xlu0 %v693
        %v695 = vpop.xlane.xlu0 %694
        %v696 = vsub.f32 %v688, %v695
        %v697 = vmul.f32 %v696, 1.442695
        %v698 = vpow.pop %v697
        %v699 = vsel %vm315, %v698, 0.0
        %700 = vadd.xlane.f32.xlu0 %v699
        %v701 = vpop.xlane.xlu0 %700
        %v702 = vrcp.pop %v701
        %v703 = vmul.f32 %v698, %v702
        %v704 = vpack.c.bf16 %v703, %v703
        %705 = vrot.lane.b32.xlu0 %v311, 40
        %v706 = vpop.permute.xlu0 %705
        %v708 = vsel %vm315, %v704, 0
        %v711 = vsel %vm379, %v706, 0
        %713 = vmatprep.subr.bf16.mxu0 0
        %714 = vmatpush1.bf16.msra.mxu0 0
        %715 = vmatprep.subr.bf16.mxu0 0
        %716 = vmatpush1.bf16.msra.mxu0 0
        %717 = vmatprep.subr.bf16.mxu0 0
        %718 = vmatpush1.bf16.msra.mxu0 0
        %719 = vmatprep.subr.bf16.mxu0 0
        %720 = vmatpush1.bf16.msra.mxu0 0
        %721 = vmatprep.subr.bf16.mxu0 0
        %722 = vmatpush1.bf16.msra.mxu0 0
        %723 = vmatprep.subr.bf16.mxu0 0
        %724 = vmatpush1.bf16.msra.mxu0 0
        %725 = vmatprep.subr.bf16.mxu0 0
        %726 = vmatpush1.bf16.msra.mxu0 0
        %727 = vmatprep.subr.bf16.mxu0 0
        %728 = vmatpush1.bf16.msra.mxu0 %v711
        %729 = vmatprep.subr.bf16.mxu0 0
        %730 = vmatpush2.bf16.msra.mxu0 0
        %731 = vmatprep.subr.bf16.mxu0 0
        %732 = vmatpush2.bf16.msra.mxu0 0
        %733 = vmatprep.subr.bf16.mxu0 0
        %734 = vmatpush2.bf16.msra.mxu0 0
        %735 = vmatprep.subr.bf16.mxu0 0
        %736 = vmatpush2.bf16.msra.mxu0 0
        %737 = vmatprep.subr.bf16.mxu0 0
        %738 = vmatpush2.bf16.msra.mxu0 0
        %739 = vmatprep.subr.bf16.mxu0 0
        %740 = vmatpush2.bf16.msra.mxu0 0
        %741 = vmatprep.subr.bf16.mxu0 0
        %742 = vmatpush2.bf16.msra.mxu0 0
        %743 = vmatprep.subr.bf16.mxu0 0
        %744 = vmatpush2.bf16.msra.mxu0 0
        %745 = vmatprep.mubr.bf16.mxu0 0
        %746 = vmatmul.mubr.bf16.gmra.mxu0 %v708
        %v747 = vpop.f32.mrf.mxu0
        %v748 = vadd.f32 0.0, %v747
        %v749 = vpop.f32.mrf.mxu0
        %v750 = vpop.f32.mrf.mxu0
        %v751 = vpop.f32.mrf.mxu0
        %752 = vdwg.mxu0
        %754 = vrot.lane.b32.xlu0 %v528, 8
        %v755 = vpop.permute.xlu0 %754
        %758 = vrot.lane.b32.xlu0 %v638, 16
        %v759 = vpop.permute.xlu0 %758
        %762 = vrot.lane.b32.xlu0 %v748, 24
        %v763 = vpop.permute.xlu0 %762
        %v765 = vsel %vm315, %v418, %v755
        %vm766 = vcmask 130048
        %v767 = vsel %vm766, %v765, %v759
        %vm768 = vcmask 195584
        %v769 = vsel %vm768, %v767, %v763
        %v770 = vpack.c.bf16 %v769, %v769
        %v771 = vld [vmem:[#allocation7] sm:$0xf]
        %v772 = vld [vmem:[#allocation7 + $0x4] sm:$0xf]
        %v773 = vld [vmem:[#allocation7 + $0x8] sm:$0xf]
        %v774 = vld [vmem:[#allocation7 + $0xc] sm:$0xf]
        %v775 = vld [vmem:[%s3] sm:$0x1]
        %v777 = vlaneseq
        %v778 = vshrl.u32 %v777, 7
        %v779 = vsub.s32 0, %v778
        %v780 = vrot.slane %v775, %v779
        %v786 = vunpack.c.l.b16 %v771
        %v787 = vunpack.c.l.b16 %v772
        %v788 = vunpack.c.l.b16 %v773
        %v789 = vunpack.c.l.b16 %v774
        %v790 = vpack.c.b16 %v787, %v786
        %v791 = vpack.c.b16 %v789, %v788
        %v795 = vsel %vm261, %v770, 0
        %797 = vmatprep.subr.bf16.mxu0 0
        %798 = vmatpush1.bf16.msra.mxu0 0
        %799 = vmatprep.subr.bf16.mxu0 0
        %800 = vmatpush1.bf16.msra.mxu0 0
        %801 = vmatprep.subr.bf16.mxu0 0
        %802 = vmatpush1.bf16.msra.mxu0 0
        %803 = vmatprep.subr.bf16.mxu0 0
        %804 = vmatpush1.bf16.msra.mxu0 0
        %805 = vmatprep.subr.bf16.mxu0 0
        %806 = vmatpush1.bf16.msra.mxu0 0
        %807 = vmatprep.subr.bf16.mxu0 0
        %808 = vmatpush1.bf16.msra.mxu0 0
        %809 = vmatprep.subr.bf16.mxu0 0
        %810 = vmatpush1.bf16.msra.mxu0 %v791
        %811 = vmatprep.subr.bf16.mxu0 0
        %812 = vmatpush1.bf16.msra.mxu0 %v790
        %813 = vmatprep.subr.bf16.mxu0 0
        %814 = vmatpush2.bf16.msra.mxu0 0
        %815 = vmatprep.subr.bf16.mxu0 0
        %816 = vmatpush2.bf16.msra.mxu0 0
        %817 = vmatprep.subr.bf16.mxu0 0
        %818 = vmatpush2.bf16.msra.mxu0 0
        %819 = vmatprep.subr.bf16.mxu0 0
        %820 = vmatpush2.bf16.msra.mxu0 0
        %821 = vmatprep.subr.bf16.mxu0 0
        %822 = vmatpush2.bf16.msra.mxu0 0
        %823 = vmatprep.subr.bf16.mxu0 0
        %824 = vmatpush2.bf16.msra.mxu0 0
        %825 = vmatprep.subr.bf16.mxu0 0
        %826 = vmatpush2.bf16.msra.mxu0 0
        %827 = vmatprep.subr.bf16.mxu0 0
        %828 = vmatpush2.bf16.msra.mxu0 0
        %829 = vmatprep.mubr.bf16.mxu0 0
        %830 = vmatmul.mubr.bf16.gmra.mxu0 %v795
        %v831 = vpop.f32.mrf.mxu0
        %v832 = vadd.f32 %v780, %v831
        %v833 = vpop.f32.mrf.mxu0
        %v834 = vpop.f32.mrf.mxu0
        %v835 = vpop.f32.mrf.mxu0
        %836 = vdwg.mxu0
        %837 = vst [vmem:[%s241] sm:$0xff] %v832
        %s838 = sand.u32 %s119, 1
        %s839 = scalar_lea.sflag [#allocation4], %s838
        %s840 = sand.u32 %s119, 1
        %s841 = smul.addr %s840, 8
        %s842 = scalar_lea.vmem [#allocation8], %s841
        // Predicated region
        $region49: #{mha_pallas.1} parent=35 // pred_check
          %p843 = pneg %p129
        $region50: #{mha_pallas.1} parent=35 // pred_check_branch
          %845 = sbr.rel (%p843) target = $region52
        $region51: #{mha_pallas.1} parent=35 // pred_region
          %s847 = ssub.s32 128, 128
          %848 = vsyncadd %s839, %s847
          %s849 = smul.addr %s22, 128
          %s850 = scalar_lea.hbm %s4, %s849
          %s852 = sshll.u32 %s842, 4
          %s853 = int_to_ptr.vmem [resolvable:$true] %s852
          %855 = dma.vmem_to_hbm [thread:$0]  %s853, 128, %s850, %s839
        $region52: #{mha_pallas.1} parent=35 // pred_fallthru
          _
      $region36: #{mha_pallas.1} parent=5 // pred_fallthru
        _
      %p856 = scmp.le.s32.totalorder 2, %s17
      // Predicated region
      $region53: #{mha_pallas.1} parent=5 // pred_check
        %p857 = pneg %p856
      $region54: #{mha_pallas.1} parent=5 // pred_check_branch
        %859 = sbr.rel (%p857) target = $region56
      $region55: #{mha_pallas.1} parent=5 // pred_region
        %s860 = ssub.s32 %s17, 2
        // Predicated region
        $region57: #{mha_pallas.1} parent=55 // pred_check
          %p861 = pneg %p135
        $region58: #{mha_pallas.1} parent=55 // pred_check_branch
          %863 = sbr.rel (%p861) target = $region60
        $region59: #{mha_pallas.1} parent=55 // pred_region
          %s864 = sand.u32 %s120, 1
          %s865 = scalar_lea.sflag [#allocation4], %s864
          %s866 = sand.u32 %s120, 1
          %s867 = smul.addr %s866, 8
          %s868 = scalar_lea.vmem [#allocation8], %s867
          %869 = dma.done %s865, 128
        $region60: #{mha_pallas.1} parent=55 // pred_fallthru
          _
      $region56: #{mha_pallas.1} parent=5 // pred_fallthru
        _
    $region6: #{mha_pallas.1} parent=1 // loop_footer
      %s21 = sadd.s32 1, %s17
    $region7: #{mha_pallas.1} parent=1 // loop_footer_branch
      %16 = sbr.rel target = $region3
    $region8: #{mha_pallas.1} parent=1 // loop_exit
      _
    %870 = vsyncpa [#allocation3], 1
    %s871 = scalar_lea.sflag [#allocation3], 1
    %872 = vsyncpa %s871, 1
    %873 = vsyncpa [#allocation6], 1
    %874 = vsyncpa [#allocation4], 1
    %s875 = scalar_lea.sflag [#allocation4], 1
    %876 = vsyncpa %s875, 1

</llo_original>
